<compile_context>
chip_gen: v6e
topology: v6e:2x2x1
jax: 0.10.0
libtpu: 0.0.40
codegen_flags: <defaults>
</compile_context>

<pallas_src>
import functools

import jax
import jax.numpy as jnp
from jax.experimental import pallas as pl
from jax.experimental.pallas import tpu as pltpu

NEG_INF = -1e9

TM, TN, TK = 512, 512, 1024
VMEM_LIMIT = 40 * 1024 * 1024


def _pick_tile(dim, target, quantum):
    """Largest tile <= target that is a multiple of `quantum` and evenly divides `dim`."""
    if dim <= target:
        return dim
    t = (target // quantum) * quantum
    while t >= quantum:
        if dim % t == 0:
            return t
        t -= quantum
    return dim


def _bf16(x):
    return x if x.dtype == jnp.bfloat16 else x.astype(jnp.bfloat16)


def _ln(x, g, b):
    mu = jnp.mean(x, axis=-1, keepdims=True)
    var = jnp.mean(jnp.square(x - mu), axis=-1, keepdims=True)
    return (x - mu) * jax.lax.rsqrt(var + 1e-5) * g + b


# ----------------------------------------------------------------------------- Pallas kernels

def _linear_kernel(x_ref, w_ref, b_ref, o_ref, acc_ref, *, activation):
    # x: (tm, tk) bf16, w: (tk, tn) bf16, b: (1, tn) f32, acc: (tm, tn) f32, o: (tm, tn) bf16
    @pl.when(pl.program_id(2) == 0)
    def _():
        acc_ref[...] = jnp.zeros_like(acc_ref)

    acc_ref[...] += jnp.dot(x_ref[...], w_ref[...], preferred_element_type=jnp.float32)

    @pl.when(pl.program_id(2) == pl.num_programs(2) - 1)
    def _():
        y = acc_ref[...] + b_ref[...]
        if activation == "gelu":
            y = jax.nn.gelu(y)      # tanh approximation
        o_ref[...] = y.astype(o_ref.dtype)


def _linear_res_ln_kernel(x_ref, w_ref, b_ref, r_ref, g_ref, bln_ref, o_ref, acc_ref):
    # Matmul + bias + residual add + LayerNorm fused in the epilogue (tn == full N == D).
    @pl.when(pl.program_id(1) == 0)
    def _():
        acc_ref[...] = jnp.zeros_like(acc_ref)

    acc_ref[...] += jnp.dot(x_ref[...], w_ref[...], preferred_element_type=jnp.float32)

    @pl.when(pl.program_id(1) == pl.num_programs(1) - 1)
    def _():
        y = acc_ref[...] + b_ref[...] + r_ref[...].astype(jnp.float32)
        o_ref[...] = _ln(y, g_ref[...], bln_ref[...]).astype(o_ref.dtype)


def _layernorm_kernel(x_ref, g_ref, b_ref, o_ref):
    o_ref[...] = _ln(x_ref[...].astype(jnp.float32), g_ref[...], b_ref[...]).astype(o_ref.dtype)


def _attention_kernel(q_ref, k_ref, v_ref, kmask_ref, o_ref, *, heads, scale, causal):
    # q_ref: (1, tq, D) bf16, k_ref/v_ref: (1, Sk, D) bf16, kmask: (1, 1, Sk) f32, o: (1, tq, D) bf16
    tq, D = q_ref.shape[1], q_ref.shape[2]
    Sk = k_ref.shape[1]
    Dh = D // heads

    q = q_ref[0] * scale          # fold softmax scale into q (one small multiply)
    k = k_ref[0]
    v = v_ref[0]

    # Padding (+ causal) additive bias built in-kernel: no S^2 mask DMA, no per-head duplication.
    bias = jnp.broadcast_to((1.0 - kmask_ref[0]) * NEG_INF, (tq, Sk))
    if causal:
        q_off = pl.program_id(1) * tq
        qi = jax.lax.broadcasted_iota(jnp.int32, (tq, Sk), 0) + q_off
        ki = jax.lax.broadcasted_iota(jnp.int32, (tq, Sk), 1)
        bias = jnp.where(ki <= qi, bias, NEG_INF)

    for h in range(heads):                      # static unroll; heads are lane slices
        sl = slice(h * Dh, (h + 1) * Dh)
        s = jax.lax.dot_general(q[:, sl], k[:, sl], (((1,), (1,)), ((), ())),
                                preferred_element_type=jnp.float32)     # [tq, Sk]
        s = s + bias
        s = s - jnp.max(s, axis=-1, keepdims=True)
        p = jnp.exp(s)
        p = p * pl.reciprocal(jnp.sum(p, axis=-1, keepdims=True), approx=True)
        out_h = jnp.dot(p.astype(v.dtype), v[:, sl],
                        preferred_element_type=jnp.float32)             # [tq, Dh]
        o_ref[0, :, sl] = out_h.astype(o_ref.dtype)                     # per-head lane store


def _lmhead_ce_kernel(x_ref, w_ref, b_ref, lab_ref, logits_ref, nll_ref,
                      acc_ref, m_sc, l_sc, t_sc):
    # Tied LM head ([V,D] weight, contract on D) fused with online cross-entropy over vocab tiles.
    j = pl.program_id(1)
    k = pl.program_id(2)
    jn = pl.num_programs(1)
    kn = pl.num_programs(2)

    @pl.when(k == 0)
    def _():
        acc_ref[...] = jnp.zeros_like(acc_ref)

    @pl.when(jnp.logical_and(j == 0, k == 0))
    def _():
        m_sc[...] = jnp.full_like(m_sc, -jnp.inf)
        l_sc[...] = jnp.zeros_like(l_sc)
        t_sc[...] = jnp.zeros_like(t_sc)

    acc_ref[...] += jax.lax.dot_general(
        x_ref[...], w_ref[...], (((1,), (1,)), ((), ())),
        preferred_element_type=jnp.float32)

    @pl.when(k == kn - 1)
    def _():
        logits = acc_ref[...] + b_ref[...]                   # f32 (tm, tv)
        logits_ref[...] = logits.astype(logits_ref.dtype)    # write once, bf16
        labels = lab_ref[...]                                # (tm, 1) int32
        tv = logits.shape[1]
        vid = jax.lax.broadcasted_iota(jnp.int32, logits.shape, 1) + j * tv
        m_new = jnp.maximum(m_sc[...], jnp.max(logits, axis=-1, keepdims=True))
        l_sc[...] = (jnp.exp(m_sc[...] - m_new) * l_sc[...]
                     + jnp.sum(jnp.exp(logits - m_new), axis=-1, keepdims=True))
        t_sc[...] += jnp.sum(jnp.where(vid == labels, logits, 0.0), axis=-1, keepdims=True)
        m_sc[...] = m_new

    @pl.when(jnp.logical_and(j == jn - 1, k == kn - 1))
    def _():
        lse = m_sc[...] + jnp.log(l_sc[...])
        nll = lse - t_sc[...]
        valid = lab_ref[...] >= 0                            # HF ignore_index = -100
        nll_ref[...] = jnp.where(valid, nll, 0.0)


# ----------------------------------------------------------------------------- Pallas wrappers

def linear(x, w, b, activation=None):
    """x: [M, K] bf16, w: [K, N] bf16, b: [N] f32 -> [M, N] bf16."""
    x = _bf16(x)
    w = _bf16(w)
    M, K = x.shape
    N = w.shape[1]
    tm = _pick_tile(M, TM, 16)
    tn = _pick_tile(N, TN, 128)
    tk = _pick_tile(K, TK, 128)
    kern = functools.partial(_linear_kernel, activation=activation)
    return pl.pallas_call(
        kern,
        grid=(M // tm, N // tn, K // tk),
        in_specs=[pl.BlockSpec((tm, tk), lambda i, j, k: (i, k)),
                  pl.BlockSpec((tk, tn), lambda i, j, k: (k, j)),
                  pl.BlockSpec((1, tn), lambda i, j, k: (0, j))],
        out_specs=pl.BlockSpec((tm, tn), lambda i, j, k: (i, j)),
        out_shape=jax.ShapeDtypeStruct((M, N), jnp.bfloat16),
        scratch_shapes=[pltpu.VMEM((tm, tn), jnp.float32)],
        compiler_params=pltpu.CompilerParams(
            dimension_semantics=("parallel", "parallel", "arbitrary"),
            vmem_limit_bytes=VMEM_LIMIT),
    )(x, w, b.reshape(1, N).astype(jnp.float32))


def linear_res_ln(x, w, b, res, g, bln):
    """Fused: LayerNorm(x @ w + b + res).  x: [M, K] bf16, w: [K, D] bf16, res: [M, D] bf16."""
    x = _bf16(x)
    w = _bf16(w)
    res = _bf16(res)
    M, K = x.shape
    D = w.shape[1]
    tm = _pick_tile(M, TM, 16)
    tk = _pick_tile(K, TK, 128)
    return pl.pallas_call(
        _linear_res_ln_kernel,
        grid=(M // tm, K // tk),
        in_specs=[pl.BlockSpec((tm, tk), lambda i, k: (i, k)),
                  pl.BlockSpec((tk, D), lambda i, k: (k, 0)),
                  pl.BlockSpec((1, D), lambda i, k: (0, 0)),
                  pl.BlockSpec((tm, D), lambda i, k: (i, 0)),
                  pl.BlockSpec((1, D), lambda i, k: (0, 0)),
                  pl.BlockSpec((1, D), lambda i, k: (0, 0))],
        out_specs=pl.BlockSpec((tm, D), lambda i, k: (i, 0)),
        out_shape=jax.ShapeDtypeStruct((M, D), jnp.bfloat16),
        scratch_shapes=[pltpu.VMEM((tm, D), jnp.float32)],
        compiler_params=pltpu.CompilerParams(
            dimension_semantics=("parallel", "arbitrary"),
            vmem_limit_bytes=VMEM_LIMIT),
    )(x, w, b.reshape(1, D).astype(jnp.float32), res,
      g.reshape(1, D).astype(jnp.float32), bln.reshape(1, D).astype(jnp.float32))


def layer_norm(x, g, b):
    """Standalone LN (embedding LN). x: [..., D] any float -> bf16."""
    *lead, D = x.shape
    x2 = x.reshape(-1, D)
    M = x2.shape[0]
    tm = _pick_tile(M, TM, 8)
    out = pl.pallas_call(
        _layernorm_kernel,
        grid=(M // tm,),
        in_specs=[pl.BlockSpec((tm, D), lambda i: (i, 0)),
                  pl.BlockSpec((1, D), lambda i: (0, 0)),
                  pl.BlockSpec((1, D), lambda i: (0, 0))],
        out_specs=pl.BlockSpec((tm, D), lambda i: (i, 0)),
        out_shape=jax.ShapeDtypeStruct((M, D), jnp.bfloat16),
        compiler_params=pltpu.CompilerParams(dimension_semantics=("parallel",)),
    )(x2, g.reshape(1, D).astype(jnp.float32), b.reshape(1, D).astype(jnp.float32))
    return out.reshape(*lead, D)


def attention(q_arr, kv_arr, kmask3, heads, causal, *, d_model, q_col, k_col, v_col):
    """Multi-head attention.

    q_arr : [B, Sq, *] bf16 — queries live in lane-block `q_col` (block width = d_model).
    kv_arr: [B, Sk, *] bf16 — keys/values live in lane-blocks `k_col` / `v_col`.
    kmask3: [B, 1, Sk] f32 (1 = keep).  Returns [B, Sq, D] bf16.
    Passing the same fused projection tensor multiple times with different BlockSpecs avoids
    any HBM slice copies; K/V block indices are constant across q-tiles, so not re-DMA'd.
    """
    B, Sq = q_arr.shape[0], q_arr.shape[1]
    Sk = kv_arr.shape[1]
    D = d_model
    Dh = D // heads
    tq = _pick_tile(Sq, 256, 16)
    kern = functools.partial(_attention_kernel, heads=heads,
                             scale=1.0 / float(Dh) ** 0.5, causal=causal)
    return pl.pallas_call(
        kern,
        grid=(B, Sq // tq),
        in_specs=[pl.BlockSpec((1, tq, D), lambda b, qi: (b, qi, q_col)),
                  pl.BlockSpec((1, Sk, D), lambda b, qi: (b, 0, k_col)),
                  pl.BlockSpec((1, Sk, D), lambda b, qi: (b, 0, v_col)),
                  pl.BlockSpec((1, 1, Sk), lambda b, qi: (b, 0, 0))],
        out_specs=pl.BlockSpec((1, tq, D), lambda b, qi: (b, qi, 0)),
        out_shape=jax.ShapeDtypeStruct((B, Sq, D), jnp.bfloat16),
        compiler_params=pltpu.CompilerParams(
            dimension_semantics=("parallel", "parallel"),
            vmem_limit_bytes=VMEM_LIMIT),
    )(_bf16(q_arr), _bf16(kv_arr), _bf16(kv_arr), kmask3)


def lm_head_ce(x, w_vd, bias_v, labels):
    """Tied LM head ([V, D] weight) fused with online cross-entropy.

    Returns (logits [M, V] bf16, per-row nll [M, 1] f32 with ignored rows zeroed).
    """
    x = _bf16(x)
    w_vd = _bf16(w_vd)
    M, K = x.shape
    V = w_vd.shape[0]
    tm = _pick_tile(M, 1024, 16)       # weight-streaming: few re-reads of the [V,D] table
    tv = _pick_tile(V, 512, 128)
    tk = _pick_tile(K, 1024, 128)
    logits, nll = pl.pallas_call(
        _lmhead_ce_kernel,
        grid=(M // tm, V // tv, K // tk),
        in_specs=[pl.BlockSpec((tm, tk), lambda i, j, k: (i, k)),
                  pl.BlockSpec((tv, tk), lambda i, j, k: (j, k)),
                  pl.BlockSpec((1, tv), lambda i, j, k: (0, j)),
                  pl.BlockSpec((tm, 1), lambda i, j, k: (i, 0))],
        out_specs=[pl.BlockSpec((tm, tv), lambda i, j, k: (i, j)),
                   pl.BlockSpec((tm, 1), lambda i, j, k: (i, 0))],
        out_shape=[jax.ShapeDtypeStruct((M, V), jnp.bfloat16),
                   jax.ShapeDtypeStruct((M, 1), jnp.float32)],
        scratch_shapes=[pltpu.VMEM((tm, tv), jnp.float32),
                        pltpu.VMEM((tm, 1), jnp.float32),
                        pltpu.VMEM((tm, 1), jnp.float32),
                        pltpu.VMEM((tm, 1), jnp.float32)],
        compiler_params=pltpu.CompilerParams(
            dimension_semantics=("parallel", "arbitrary", "arbitrary"),
            vmem_limit_bytes=VMEM_LIMIT),
    )(x, w_vd, bias_v.reshape(1, V).astype(jnp.float32),
      labels.reshape(M, 1).astype(jnp.int32))
    return logits, nll


# ----------------------------------------------------------------------------- model glue

def _self_attention_block(h, p, ln, kmask3, heads, causal):
    B, S, D = h.shape
    x2d = h.reshape(-1, D)
    qkv = linear(x2d, p["w_qkv"], p["b_qkv"]).reshape(B, S, 3 * D)    # fused QKV
    a = attention(qkv, qkv, kmask3, heads, causal, d_model=D, q_col=0, k_col=1, v_col=2)
    o = linear_res_ln(a.reshape(-1, D), p["wo"], p["bo"], x2d, ln["g"], ln["b"])
    return o.reshape(B, S, D)


def _cross_attention_block(h, enc, p, ln, enc_kmask3, heads):
    B, Sq, D = h.shape
    Sk = enc.shape[1]
    x2d = h.reshape(-1, D)
    q = linear(x2d, p["wq"], p["bq"]).reshape(B, Sq, D)
    kv = linear(enc.reshape(-1, D), p["w_kv"], p["b_kv"]).reshape(B, Sk, 2 * D)  # fused KV
    a = attention(q, kv, enc_kmask3, heads, False, d_model=D, q_col=0, k_col=0, v_col=1)
    o = linear_res_ln(a.reshape(-1, D), p["wo"], p["bo"], x2d, ln["g"], ln["b"])
    return o.reshape(B, Sq, D)


def _ffn_block(h, lyr):
    B, S, D = h.shape
    x2d = h.reshape(-1, D)
    f1 = linear(x2d, lyr["fc1_w"], lyr["fc1_b"], activation="gelu")
    o = linear_res_ln(f1, lyr["fc2_w"], lyr["fc2_b"], x2d,
                      lyr["final_ln"]["g"], lyr["final_ln"]["b"])
    return o.reshape(B, S, D)


def kobart_forward(params, input_ids, decoder_input_ids, labels, cfg):
    """Mirrors KoBARTConditionalGeneration.forward: padding masks + BART + token CE loss."""
    pad = cfg["pad_token_id"]
    H = cfg["heads"]
    D = cfg["d_model"]
    V = cfg["vocab"]

    attention_mask = (input_ids != pad).astype(jnp.float32)            # input_ids.ne(pad).float()
    dec_attention_mask = (decoder_input_ids != pad).astype(jnp.float32)

    B, Se = input_ids.shape
    Sd = decoder_input_ids.shape[1]
    enc_kmask3 = attention_mask.reshape(B, 1, Se)
    dec_kmask3 = dec_attention_mask.reshape(B, 1, Sd)

    # ---------------- encoder ----------------
    # TODO(synk): token/position embedding lookup (gather) stays in plain JAX.
    pos_e = jnp.arange(Se) + 2                                          # BART position offset
    h = (params["embed_tokens"][input_ids].astype(jnp.float32)
         + params["embed_positions"][pos_e][None])
    h = layer_norm(h, params["enc_ln_emb"]["g"], params["enc_ln_emb"]["b"])
    for lyr in params["enc_layers"]:
        h = _self_attention_block(h, lyr["self_attn"], lyr["self_ln"], enc_kmask3, H, causal=False)
        h = _ffn_block(h, lyr)
    enc_out = h

    # ---------------- decoder ----------------
    pos_d = jnp.arange(Sd) + 2
    h = (params["embed_tokens"][decoder_input_ids].astype(jnp.float32)
         + params["embed_positions"][pos_d][None])
    h = layer_norm(h, params["dec_ln_emb"]["g"], params["dec_ln_emb"]["b"])
    for lyr in params["dec_layers"]:
        h = _self_attention_block(h, lyr["self_attn"], lyr["self_ln"], dec_kmask3, H, causal=True)
        h = _cross_attention_block(h, enc_out, lyr["cross_attn"], lyr["cross_ln"], enc_kmask3, H)
        h = _ffn_block(h, lyr)

    # tied LM head (weight used un-transposed: [V, D]) + final_logits_bias, fused with CE.
    logits2d, nll = lm_head_ce(h.reshape(-1, D), params["embed_tokens"],
                               params["final_logits_bias"], labels.reshape(-1))
    valid = (labels.reshape(-1) >= 0).astype(jnp.float32)
    loss = jnp.sum(nll) / jnp.maximum(jnp.sum(valid), 1.0)
    logits = logits2d.reshape(B, Sd, V)
    return {"loss": loss, "logits": logits}


# ----------------------------------------------------------------------------- parameter init

def init_params(key, cfg):
    D, V, F, L = cfg["d_model"], cfg["vocab"], cfg["ffn"], cfg["layers"]
    keys = iter(jax.random.split(key, 256))

    def nrm(shape, dtype=jnp.bfloat16):
        return (0.02 * jax.random.normal(next(keys), shape)).astype(dtype)

    def self_attn_p():
        return dict(w_qkv=nrm((D, 3 * D)), b_qkv=jnp.zeros(3 * D, jnp.float32),
                    wo=nrm((D, D)), bo=jnp.zeros(D, jnp.float32))

    def cross_attn_p():
        return dict(wq=nrm((D, D)), bq=jnp.zeros(D, jnp.float32),
                    w_kv=nrm((D, 2 * D)), b_kv=jnp.zeros(2 * D, jnp.float32),
                    wo=nrm((D, D)), bo=jnp.zeros(D, jnp.float32))

    def ln_p():
        return dict(g=jnp.ones(D, jnp.float32), b=jnp.zeros(D, jnp.float32))

    params = dict(
        embed_tokens=nrm((V, D)),                                   # bf16, tied LM head
        embed_positions=nrm((cfg["max_pos"] + 2, D), jnp.float32),
        enc_ln_emb=ln_p(), dec_ln_emb=ln_p(),
        final_logits_bias=jnp.zeros(V, jnp.float32),
        enc_layers=[], dec_layers=[],
    )
    for _ in range(L):
        params["enc_layers"].append(dict(
            self_attn=self_attn_p(), self_ln=ln_p(),
            fc1_w=nrm((D, F)), fc1_b=jnp.zeros(F, jnp.float32),
            fc2_w=nrm((F, D)), fc2_b=jnp.zeros(D, jnp.float32),
            final_ln=ln_p()))
        params["dec_layers"].append(dict(
            self_attn=self_attn_p(), self_ln=ln_p(),
            cross_attn=cross_attn_p(), cross_ln=ln_p(),
            fc1_w=nrm((D, F)), fc1_b=jnp.zeros(F, jnp.float32),
            fc2_w=nrm((F, D)), fc2_b=jnp.zeros(D, jnp.float32),
            final_ln=ln_p()))
    return params


# ----------------------------------------------------------------------------- main

if __name__ == "__main__":
    # d_model kept at 128 so the fused-QKV lane-block slicing (block width = d_model) is
    # 128-lane aligned; other dims small for a quick smoke test.
    cfg = dict(vocab=256, d_model=128, heads=4, ffn=256, layers=2, pad_token_id=3, max_pos=64)

    key = jax.random.PRNGKey(0)
    pkey, ikey, dkey = jax.random.split(key, 3)
    params = init_params(pkey, cfg)

    B, Se, Sd = 2, 8, 8
    input_ids = jax.random.randint(ikey, (B, Se), 4, cfg["vocab"], dtype=jnp.int32)
    decoder_input_ids = jax.random.randint(dkey, (B, Sd), 4, cfg["vocab"], dtype=jnp.int32)

    # pad the tails of the second sequence so the .ne(pad) mask path is exercised
    enc_len = jnp.array([8, 5])
    dec_len = jnp.array([8, 6])
    epos = jnp.arange(Se)[None, :]
    dpos = jnp.arange(Sd)[None, :]
    input_ids = jnp.where(epos < enc_len[:, None], input_ids, cfg["pad_token_id"])
    decoder_input_ids = jnp.where(dpos < dec_len[:, None], decoder_input_ids, cfg["pad_token_id"])
    labels = jnp.where(dpos < dec_len[:, None], decoder_input_ids, -100)  # HF ignore_index

    out = kobart_forward(params, input_ids, decoder_input_ids, labels, cfg)
    jax.block_until_ready(out)

    assert out["logits"].shape == (B, Sd, cfg["vocab"])
    assert out["loss"].shape == ()
    assert bool(jnp.isfinite(out["loss"]))
    print("KERNEL_OK")
</pallas_src>

<mosaic_0001>
module attributes {stable_mosaic.version = 11 : i64} {
  func.func @_layernorm_kernel(%arg0: i32, %arg1: memref<16x128xf32, #tpu.memory_space<vmem>>, %arg2: memref<1x128xf32, #tpu.memory_space<vmem>>, %arg3: memref<1x128xf32, #tpu.memory_space<vmem>>, %arg4: memref<16x128xbf16, #tpu.memory_space<vmem>>) attributes {dimension_semantics = [#tpu.dimension_semantics<parallel>], iteration_bounds = array<i64: 1>, scalar_prefetch = 0 : i64, scratch_operands = 0 : i64, tpu.core_type = #tpu.core_type<tc>, window_params = [{transform_indices = @transform_0, window_bounds = array<i64: 16, 128>}, {pipeline_mode = #tpu.pipeline_mode<synchronous>, transform_indices = @transform_1, window_bounds = array<i64: 1, 128>}, {pipeline_mode = #tpu.pipeline_mode<synchronous>, transform_indices = @transform_2, window_bounds = array<i64: 1, 128>}, {transform_indices = @transform_3, window_bounds = array<i64: 16, 128>}]} {
    %c0 = arith.constant 0 : index
    %c0_0 = arith.constant 0 : index
    %0 = vector.load %arg1[%c0, %c0_0] : memref<16x128xf32, #tpu.memory_space<vmem>>, vector<16x128xf32>
    %c0_1 = arith.constant 0 : index
    %c0_2 = arith.constant 0 : index
    %1 = vector.load %arg2[%c0_1, %c0_2] : memref<1x128xf32, #tpu.memory_space<vmem>>, vector<1x128xf32>
    %c0_3 = arith.constant 0 : index
    %c0_4 = arith.constant 0 : index
    %2 = vector.load %arg3[%c0_3, %c0_4] : memref<1x128xf32, #tpu.memory_space<vmem>>, vector<1x128xf32>
    %cst = arith.constant dense<0.000000e+00> : vector<16xf32>
    %3 = vector.multi_reduction <add>, %0, %cst [1] : vector<16x128xf32> to vector<16xf32>
    %4 = vector.shape_cast %3 : vector<16xf32> to vector<16x1xf32>
    %cst_5 = arith.constant 1.280000e+02 : f32
    %5 = vector.broadcast %cst_5 : f32 to vector<16x1xf32>
    %6 = arith.divf %4, %5 : vector<16x1xf32>
    %7 = vector.broadcast %6 : vector<16x1xf32> to vector<16x128xf32>
    %8 = arith.subf %0, %7 : vector<16x128xf32>
    %9 = arith.mulf %8, %8 : vector<16x128xf32>
    %cst_6 = arith.constant dense<0.000000e+00> : vector<16xf32>
    %10 = vector.multi_reduction <add>, %9, %cst_6 [1] : vector<16x128xf32> to vector<16xf32>
    %11 = vector.shape_cast %10 : vector<16xf32> to vector<16x1xf32>
    %cst_7 = arith.constant 1.280000e+02 : f32
    %12 = vector.broadcast %cst_7 : f32 to vector<16x1xf32>
    %13 = arith.divf %11, %12 : vector<16x1xf32>
    %14 = vector.broadcast %6 : vector<16x1xf32> to vector<16x128xf32>
    %15 = arith.subf %0, %14 : vector<16x128xf32>
    %cst_8 = arith.constant 9.99999974E-6 : f32
    %16 = vector.broadcast %cst_8 : f32 to vector<16x1xf32>
    %17 = arith.addf %13, %16 : vector<16x1xf32>
    %18 = math.rsqrt %17 : vector<16x1xf32>
    %19 = vector.broadcast %18 : vector<16x1xf32> to vector<16x128xf32>
    %20 = arith.mulf %15, %19 : vector<16x128xf32>
    %21 = vector.broadcast %1 : vector<1x128xf32> to vector<16x128xf32>
    %22 = arith.mulf %20, %21 : vector<16x128xf32>
    %23 = vector.broadcast %2 : vector<1x128xf32> to vector<16x128xf32>
    %24 = arith.addf %22, %23 : vector<16x128xf32>
    %25 = arith.truncf %24 : vector<16x128xf32> to vector<16x128xbf16>
    %c0_9 = arith.constant 0 : index
    %c0_10 = arith.constant 0 : index
    %26 = vector.load %arg4[%c0_9, %c0_10] : memref<16x128xbf16, #tpu.memory_space<vmem>>, vector<16x128xbf16>
    tpu.vector_store %arg4[%c0_9, %c0_10], %25 {strides = array<i32>} : memref<16x128xbf16, #tpu.memory_space<vmem>>, vector<16x128xbf16>,
    return
  }
  func.func @transform_0(%arg0: i32) -> (i32, i32) {
    %c0_i32 = arith.constant 0 : i32
    %c0_i32_0 = arith.constant 0 : i32
    return %arg0, %c0_i32 : i32, i32
  }
  func.func @transform_1(%arg0: i32) -> (i32, i32) {
    %c0_i32 = arith.constant 0 : i32
    %c0_i32_0 = arith.constant 0 : i32
    %c0_i32_1 = arith.constant 0 : i32
    return %c0_i32, %c0_i32_0 : i32, i32
  }
  func.func @transform_2(%arg0: i32) -> (i32, i32) {
    %c0_i32 = arith.constant 0 : i32
    %c0_i32_0 = arith.constant 0 : i32
    %c0_i32_1 = arith.constant 0 : i32
    return %c0_i32, %c0_i32_0 : i32, i32
  }
  func.func @transform_3(%arg0: i32) -> (i32, i32) {
    %c0_i32 = arith.constant 0 : i32
    %c0_i32_0 = arith.constant 0 : i32
    return %arg0, %c0_i32 : i32, i32
  }
}

</mosaic_0001>

<llo_original>
// kernel: tpu_custom_call.1
$region0: #{tpu_custom_call.1}
  #allocation0 [shape = 'u32[]', space=smem, size = 0x4, offset = 0x4, fixed_abs, tag = 'smem constant byte address 0x4 - core index']
  #allocation1 [shape = 'u32[144,128]{1,0:T(1,128)}', space=vmem, size = 0x12000, scoped, tag = 'internal scratch']
  %s0 = inlined_call_operand.hbm [shape: f32[16,128], index: 0, kind: input, shape index: {}]
  %s1 = inlined_call_operand.vmem [shape: f32[1,128], index: 1, kind: input, shape index: {}]
  %s2 = inlined_call_operand.vmem [shape: f32[1,128], index: 2, kind: input, shape index: {}]
  %s3 = inlined_call_operand.hbm [shape: bf16[16,128], index: 3, kind: output, shape index: {}]
  %s4 = sld [smem:[#allocation0]]
  $region26: #{tpu_custom_call.1} parent=0
    _
  %s6 = ssub.s32 1, %s4
  %s7 = scalar_select 0, %s6, %s4
  $region1: #{tpu_custom_call.1} parent=0
    #allocation2 [shape = 'u8[8192]{0}', space=vmem, size = 0x2000, scoped, tag = 'input window, operand 0, single buffered']
    #allocation3 [shape = 's32[1]{0}', space=sflag, size = 0x4, scoped, tag = 'scoped memory for tpu_custom_call.1']
    #allocation4 [shape = 's32[1]{0}', space=sflag, size = 0x4, scoped, tag = 'scoped memory for tpu_custom_call.1']
    #allocation5 [shape = 'u8[4096]{0}', space=vmem, size = 0x1000, scoped, tag = 'output window, operand 0, single buffered']
    %8 = vsyncpa [#allocation3], 0
    %9 = vsyncpa [#allocation4], 0
    // Predicated region
    $region2: #{tpu_custom_call.1} parent=1 // pred_check
      _
    $region3: #{tpu_custom_call.1} parent=1 // pred_check_branch
      %11 = sbr.rel (0) target = $region5
    $region4: #{tpu_custom_call.1} parent=1 // pred_region
      %s13 = ssub.s32 256, 256
      %14 = vsyncadd [#allocation3], %s13
      %s15 = sshll.u32 [#allocation2], 4
      %s16 = int_to_ptr.vmem [resolvable:$true] %s15
      %21 = dma.hbm_to_vmem [thread:$0]  %s0, 256, %s16, [#allocation3], 128, 128, 8
    $region5: #{tpu_custom_call.1} parent=1 // pred_fallthru
      _
    // Predicated region
    $region6: #{tpu_custom_call.1} parent=1 // pred_check
      _
    $region7: #{tpu_custom_call.1} parent=1 // pred_check_branch
      %23 = sbr.rel (0) target = $region9
    $region8: #{tpu_custom_call.1} parent=1 // pred_region
      _
    $region9: #{tpu_custom_call.1} parent=1 // pred_fallthru
      _
    // Predicated region
    $region10: #{tpu_custom_call.1} parent=1 // pred_check
      _
    $region11: #{tpu_custom_call.1} parent=1 // pred_check_branch
      %25 = sbr.rel (0) target = $region13
    $region12: #{tpu_custom_call.1} parent=1 // pred_region
      _
    $region13: #{tpu_custom_call.1} parent=1 // pred_fallthru
      _
    // Predicated region
    $region14: #{tpu_custom_call.1} parent=1 // pred_check
      _
    $region15: #{tpu_custom_call.1} parent=1 // pred_check_branch
      %27 = sbr.rel (0) target = $region17
    $region16: #{tpu_custom_call.1} parent=1 // pred_region
      %28 = dma.done [#allocation3], 256
    $region17: #{tpu_custom_call.1} parent=1 // pred_fallthru
      _
    %v29 = vld [vmem:[#allocation2] sm:$0xff]
    %v30 = vld [vmem:[#allocation2 + $0x8] sm:$0xff]
    %v31 = vld [vmem:[%s1] sm:$0x1]
    %v32 = vld [vmem:[%s2] sm:$0x1]
    %33 = vadd.xlane.f32.xlu0 %v29
    %v34 = vpop.xlane.xlu0 %33
    %35 = vadd.xlane.f32.xlu0 %v30
    %v36 = vpop.xlane.xlu0 %35
    %v37 = vrcp.pop 128.0
    %v38 = vmul.f32 %v34, %v37
    %v39 = vmul.f32 %v36, %v37
    %v40 = vsub.f32 %v29, %v38
    %v41 = vsub.f32 %v30, %v39
    %v42 = vmul.f32 %v40, %v40
    %v43 = vmul.f32 %v41, %v41
    %44 = vadd.xlane.f32.xlu0 %v42
    %v45 = vpop.xlane.xlu0 %44
    %46 = vadd.xlane.f32.xlu0 %v43
    %v47 = vpop.xlane.xlu0 %46
    %v48 = vmul.f32 %v45, %v37
    %v49 = vmul.f32 %v47, %v37
    %v50 = vadd.f32 %v48, 1e-05
    %v51 = vadd.f32 %v49, 1e-05
    %v52 = vrsqrt.pop %v50
    %v53 = vrsqrt.pop %v51
    %v54 = vmul.f32 %v40, %v52
    %v55 = vmul.f32 %v41, %v53
    %v57 = vlaneseq
    %v58 = vshrl.u32 %v57, 7
    %v59 = vsub.s32 0, %v58
    %v60 = vrot.slane %v31, %v59
    %v62 = vmul.f32 %v54, %v60
    %v63 = vmul.f32 %v55, %v60
    %v65 = vlaneseq
    %v66 = vshrl.u32 %v65, 7
    %v67 = vsub.s32 0, %v66
    %v68 = vrot.slane %v32, %v67
    %v70 = vadd.f32 %v62, %v68
    %v71 = vadd.f32 %v63, %v68
    %v72 = vpack.c.bf16 %v71, %v70
    %v74 = vunpack.c.l.b16 %v72
    %v75 = vunpack.c.h.b16 %v72
    %v76 = vpack.c.b16 %v74, %v74
    %v77 = vpack.c.b16 %v75, %v75
    %80 = vst [vmem:[#allocation5] sm:$0xf] %v76
    %81 = vst [vmem:[#allocation5 + $0x4] sm:$0xf] %v77
    // Predicated region
    $region18: #{tpu_custom_call.1} parent=1 // pred_check
      _
    $region19: #{tpu_custom_call.1} parent=1 // pred_check_branch
      %83 = sbr.rel (0) target = $region21
    $region20: #{tpu_custom_call.1} parent=1 // pred_region
      %s85 = ssub.s32 128, 128
      %86 = vsyncadd [#allocation4], %s85
      %s87 = sshll.u32 [#allocation5], 4
      %s88 = int_to_ptr.vmem [resolvable:$true] %s87
      %93 = dma.vmem_to_hbm [thread:$0]  %s88, 128, %s3, [#allocation4], 64, 64, 4
    $region21: #{tpu_custom_call.1} parent=1 // pred_fallthru
      _
    // Predicated region
    $region22: #{tpu_custom_call.1} parent=1 // pred_check
      _
    $region23: #{tpu_custom_call.1} parent=1 // pred_check_branch
      %95 = sbr.rel (0) target = $region25
    $region24: #{tpu_custom_call.1} parent=1 // pred_region
      %96 = dma.done [#allocation4], 128
    $region25: #{tpu_custom_call.1} parent=1 // pred_fallthru
      _
    %97 = vsyncpa [#allocation3], 1
    %98 = vsyncpa [#allocation4], 1

</llo_original>
